<compile_context>
chip_gen: v7x
topology: tpu7x:2x2x1
jax: 0.10.0
libtpu: 0.0.40
codegen_flags: <defaults>
</compile_context>

<pallas_src>
import math

import jax
import jax.numpy as jnp
from jax.experimental import pallas as pl
from jax.experimental.pallas import tpu as pltpu


def _sap_kernel(x_ref, s_ref, chan_ref, sel_ref, wx_ref, ws_ref, o_ref,
                acc_ref):
    """One (row-block i, hw-block k) grid step.

    x_ref   : (TR, THW)   rows = flattened (batch, channel), lanes = spatial
    s_ref   : (TB, SAL)   flattened saliency for the batch rows of block i
    chan_ref: (TR, CPAD)  chan[r, c] = 1 iff c == r % C  (channel one-hot)
    sel_ref : (TB, TR)    sel[b, r] = 1 iff r // C == b  (batch-row selector)
    wx_ref  : (CPAD, OUT) pooled-branch weight, 1/(H*W) folded in
    ws_ref  : (SAL, OUT)  saliency-branch weight
    o_ref   : (TB, OUT)   output block (lane dim padded to a multiple of 128)
    acc_ref : (TR, 128)   f32 lane-partial spatial sums (scratch across k)
    """
    k = pl.program_id(1)

    @pl.when(k == 0)
    def _init():
        acc_ref[...] = jnp.zeros_like(acc_ref)

    thw = x_ref.shape[1]
    n_full = thw // 128
    # Full-lane VALU adds only: fold each 128-lane chunk into the partials.
    if n_full > 0:
        partial = x_ref[:, 0:128].astype(jnp.float32)
        for j in range(1, n_full):
            partial = partial + x_ref[:, j * 128:(j + 1) * 128].astype(
                jnp.float32)
        acc_ref[...] += partial
    rem = thw - n_full * 128
    if rem:  # irregular tail (hw not a multiple of 128): fold into lane 0
        acc_ref[:, 0:1] += jnp.sum(
            x_ref[:, n_full * 128:].astype(jnp.float32), axis=-1,
            keepdims=True)

    @pl.when(k == pl.num_programs(1) - 1)
    def _finalize():
        # Single cross-lane reduce of the lane-partials.
        rowsum = jnp.sum(acc_ref[...], axis=-1, keepdims=True)     # (TR, 1)
        pooled_rows = rowsum * chan_ref[...]                        # (TR, CPAD)
        pooled = jnp.dot(sel_ref[...], pooled_rows,
                         preferred_element_type=jnp.float32)        # (TB, CPAD)
        f = jnp.dot(pooled, wx_ref[...],
                    preferred_element_type=jnp.float32)             # (TB, OUT)
        f = f + jnp.dot(s_ref[...].astype(jnp.float32), ws_ref[...],
                        preferred_element_type=jnp.float32)
        o_ref[...] = f.astype(o_ref.dtype)


def _tpu_vmem_capacity_bytes():
    """Physical VMEM capacity; conservative (v7x-sized) fallback."""
    try:
        return int(pltpu.get_tpu_info().vmem_capacity_bytes)
    except Exception:
        return 64 * 1024 * 1024


def _choose_row_tile(bc, c, max_rows=1024):
    """Row tile over the flattened B*C axis: a multiple of lcm(8, C) that
    divides bc, capped so there are >= 2 row blocks when possible (keeps both
    v7x TensorCores busy); falls back to the full extent otherwise."""
    step = (8 * c) // math.gcd(8, c)
    if bc % step != 0 or bc <= step:
        return bc
    cap = min(max_rows, bc // 2)
    cap = max(step, (cap // step) * step)
    tile = cap
    while tile >= step:
        if bc % tile == 0:
            return tile
        tile -= step
    return bc


def _choose_hw_tile(hw, tr, itemsize, budget_bytes):
    """Lane (H*W) tile: largest multiple of 128 dividing hw whose (tr, thw)
    block fits within budget_bytes; full extent if hw is not 128-aligned."""
    if hw % 128 != 0:
        return hw
    max_lanes = budget_bytes // max(1, tr * itemsize)
    max_lanes = max(128, (max_lanes // 128) * 128)
    if hw <= max_lanes:
        return hw
    tile = max_lanes
    while tile >= 128:
        if hw % tile == 0:
            return tile
        tile -= 128
    return hw


def make_sap_forward(weight, x_shape, s_shape, *, x_dtype=jnp.float32,
                     row_tile=None, hw_tile=None):
    """Build a cached forward fn for fixed (weight, shapes, dtype).

    weight: (out_ch, C + Sh*Sw) float, PyTorch nn.Linear layout, bias=False.
    Returns fwd(x, s) -> (B, out_ch); constants are precomputed once here.
    """
    B, C, H, W = x_shape
    sal = s_shape[1] * s_shape[2]
    out_ch = weight.shape[0]
    assert weight.shape[1] == C + sal

    hw = H * W
    bc = B * C
    itemsize = jnp.dtype(x_dtype).itemsize

    # ---- per-generation VMEM budgeting -----------------------------------
    vmem_cap = _tpu_vmem_capacity_bytes()
    is_small_vmem = vmem_cap <= 64 * 1024 * 1024          # v7x-class part
    vmem_limit = min((vmem_cap * 3) // 4, 100 * 1024 * 1024)
    x_buffers = 3 if is_small_vmem else 2                 # triple-buffer v7x
    x_stream_budget = (36 if is_small_vmem else 56) * 1024 * 1024
    per_buf_budget = x_stream_budget // x_buffers

    # ---- tiling -----------------------------------------------------------
    tr = _choose_row_tile(bc, C) if row_tile is None else row_tile
    thw = (_choose_hw_tile(hw, tr, itemsize, per_buf_budget)
           if hw_tile is None else hw_tile)
    assert bc % tr == 0 and tr % C == 0
    assert hw % thw == 0
    tb = tr // C
    n_rows = bc // tr
    n_hw = hw // thw

    # Lane-dense padding (unmasked stores / aligned dots); sliced off later.
    out_pad = ((out_ch + 127) // 128) * 128
    c_pad = ((C + 127) // 128) * 128

    # ---- constants (computed once, baked into the jitted callable) --------
    w = jnp.asarray(weight, dtype=jnp.float32)
    # Pooled branch weight with the 1/(H*W) mean scale folded in.
    wx = jnp.zeros((c_pad, out_pad), jnp.float32)
    wx = wx.at[:C, :out_ch].set(w[:, :C].T / float(hw))
    # Saliency branch weight.
    ws = jnp.zeros((sal, out_pad), jnp.float32)
    ws = ws.at[:, :out_ch].set(w[:, C:].T)
    rows = jnp.arange(tr)
    # sel[b, r] = 1 iff flattened row r belongs to local batch row b.
    sel = (rows[None, :] // C == jnp.arange(tb)[:, None]).astype(jnp.float32)
    # chan[r, c] = 1 iff row r is channel c.
    chan = (rows[:, None] % C == jnp.arange(c_pad)[None, :]).astype(
        jnp.float32)

    # Only request a third x buffer when the reduction is long enough to use it.
    x_spec_kwargs = {}
    if x_buffers > 2 and n_hw >= x_buffers:
        x_spec_kwargs["pipeline_mode"] = pl.Buffered(x_buffers)

    call = pl.pallas_call(
        _sap_kernel,
        out_shape=jax.ShapeDtypeStruct((B, out_pad), x_dtype),
        grid=(n_rows, n_hw),
        in_specs=[
            # x stream: the only big operand; auto multi-buffered by Pallas.
            pl.BlockSpec((tr, thw), lambda i, k: (i, k), **x_spec_kwargs),
            pl.BlockSpec((tb, sal), lambda i, k: (i, 0)),
            # Constant index maps -> these blocks stay VMEM-resident.
            pl.BlockSpec((tr, c_pad), lambda i, k: (0, 0)),
            pl.BlockSpec((tb, tr), lambda i, k: (0, 0)),
            pl.BlockSpec((c_pad, out_pad), lambda i, k: (0, 0)),
            pl.BlockSpec((sal, out_pad), lambda i, k: (0, 0)),
        ],
        out_specs=pl.BlockSpec((tb, out_pad), lambda i, k: (i, 0)),
        scratch_shapes=[pltpu.VMEM((tr, 128), jnp.float32)],
        compiler_params=pltpu.CompilerParams(
            # Row blocks independent -> "parallel" (both v7x TCs);
            # HW axis is the reduction -> "arbitrary".
            dimension_semantics=("parallel", "arbitrary"),
            vmem_limit_bytes=int(vmem_limit),
        ),
    )

    @jax.jit
    def forward(x, s):
        x2d = x.reshape(bc, hw)
        s_flat = s.reshape(B, sal)
        out = call(x2d, s_flat, chan, sel, wx, ws)
        return out[:, :out_ch]

    return forward


def sap_module_forward(x, s, weight, **kwargs):
    """Convenience one-shot wrapper (prefer make_sap_forward for reuse)."""
    fwd = make_sap_forward(weight, x.shape, s.shape, x_dtype=x.dtype, **kwargs)
    return fwd(x, s)


def sap_reference(x, s, weight):
    B, C, H, W = x.shape
    pooled = jnp.mean(x.reshape(B, C, H * W), axis=-1)
    feat = jnp.concatenate([pooled, s.reshape(B, -1)], axis=1)
    return feat @ weight.T


if __name__ == "__main__":
    # Small shapes consistent with the module.
    B, C, H, W = 2, 4, 16, 16          # input_channel = 4
    saliency_size = 8                  # sal_feat_len = 64
    out_channel = 32
    # dropout is identity at inference.

    key = jax.random.PRNGKey(0)
    kx, ks, kw = jax.random.split(key, 3)
    x = jax.random.normal(kx, (B, C, H, W), dtype=jnp.float32)
    s = jax.random.normal(ks, (B, saliency_size, saliency_size),
                          dtype=jnp.float32)
    # Deterministic Linear weight (nn.Linear layout: (out, in)), bias=False.
    weight = jax.random.normal(
        kw, (out_channel, C + saliency_size * saliency_size),
        dtype=jnp.float32) * 0.05

    # hw_tile=128 so the demo exercises the multi-step HW reduction pipeline
    # (grid = (1, 2)) even at these tiny shapes.
    fwd = make_sap_forward(weight, x.shape, s.shape, x_dtype=x.dtype,
                           hw_tile=128)
    out = jax.block_until_ready(fwd(x, s))

    ref = sap_reference(x, s, weight)
    assert out.shape == (B, out_channel)
    assert jnp.allclose(out, ref, atol=1e-4, rtol=1e-4), "mismatch vs reference"
    print("KERNEL_OK")
</pallas_src>

<mosaic_0001>
module attributes {stable_mosaic.version = 11 : i64} {
  func.func @_sap_kernel(%arg0: i32, %arg1: i32, %arg2: memref<8x128xf32, #tpu.memory_space<vmem>>, %arg3: memref<2x64xf32, #tpu.memory_space<vmem>>, %arg4: memref<8x128xf32, #tpu.memory_space<vmem>>, %arg5: memref<2x8xf32, #tpu.memory_space<vmem>>, %arg6: memref<128x128xf32, #tpu.memory_space<vmem>>, %arg7: memref<64x128xf32, #tpu.memory_space<vmem>>, %arg8: memref<2x128xf32, #tpu.memory_space<vmem>>, %arg9: memref<8x128xf32, #tpu.memory_space<vmem>>) attributes {dimension_semantics = [#tpu.dimension_semantics<parallel>, #tpu.dimension_semantics<arbitrary>], iteration_bounds = array<i64: 1, 2>, scalar_prefetch = 0 : i64, scratch_operands = 1 : i64, tpu.core_type = #tpu.core_type<tc>, window_params = [{transform_indices = @transform_0, window_bounds = array<i64: 8, 128>}, {transform_indices = @transform_1, window_bounds = array<i64: 2, 64>}, {pipeline_mode = #tpu.pipeline_mode<synchronous>, transform_indices = @transform_2, window_bounds = array<i64: 8, 128>}, {pipeline_mode = #tpu.pipeline_mode<synchronous>, transform_indices = @transform_3, window_bounds = array<i64: 2, 8>}, {pipeline_mode = #tpu.pipeline_mode<synchronous>, transform_indices = @transform_4, window_bounds = array<i64: 128, 128>}, {pipeline_mode = #tpu.pipeline_mode<synchronous>, transform_indices = @transform_5, window_bounds = array<i64: 64, 128>}, {transform_indices = @transform_6, window_bounds = array<i64: 2, 128>}]} {
    %c0_i32 = arith.constant 0 : i32
    %0 = arith.cmpi eq, %arg1, %c0_i32 : i32
    %1 = arith.extui %0 : i1 to i32
    %c0_i32_0 = arith.constant 0 : i32
    %2 = arith.cmpi ne, %1, %c0_i32_0 : i32
    scf.if %2 {
      %cst = arith.constant 0.000000e+00 : f32
      %10 = vector.broadcast %cst : f32 to vector<8x128xf32>
      %c0_7 = arith.constant 0 : index
      %c0_8 = arith.constant 0 : index
      %11 = vector.load %arg9[%c0_7, %c0_8] : memref<8x128xf32, #tpu.memory_space<vmem>>, vector<8x128xf32>
      tpu.vector_store %arg9[%c0_7, %c0_8], %10 {strides = array<i32>} : memref<8x128xf32, #tpu.memory_space<vmem>>, vector<8x128xf32>,
    } else {
    }
    %c0 = arith.constant 0 : index
    %c0_1 = arith.constant 0 : index
    %3 = vector.load %arg2[%c0, %c0_1] : memref<8x128xf32, #tpu.memory_space<vmem>>, vector<8x128xf32>
    %c0_2 = arith.constant 0 : index
    %c0_3 = arith.constant 0 : index
    %4 = vector.load %arg9[%c0_2, %c0_3] : memref<8x128xf32, #tpu.memory_space<vmem>>, vector<8x128xf32>
    %5 = arith.addf %4, %3 : vector<8x128xf32>
    %c0_4 = arith.constant 0 : index
    %c0_5 = arith.constant 0 : index
    %6 = vector.load %arg9[%c0_4, %c0_5] : memref<8x128xf32, #tpu.memory_space<vmem>>, vector<8x128xf32>
    tpu.vector_store %arg9[%c0_4, %c0_5], %5 {strides = array<i32>} : memref<8x128xf32, #tpu.memory_space<vmem>>, vector<8x128xf32>,
    %c1_i32 = arith.constant 1 : i32
    %7 = arith.cmpi eq, %arg1, %c1_i32 : i32
    %8 = arith.extui %7 : i1 to i32
    %c0_i32_6 = arith.constant 0 : i32
    %9 = arith.cmpi ne, %8, %c0_i32_6 : i32
    scf.if %9 {
      %c0_7 = arith.constant 0 : index
      %c0_8 = arith.constant 0 : index
      %10 = vector.load %arg9[%c0_7, %c0_8] : memref<8x128xf32, #tpu.memory_space<vmem>>, vector<8x128xf32>
      %cst = arith.constant dense<0.000000e+00> : vector<8xf32>
      %11 = vector.multi_reduction <add>, %10, %cst [1] : vector<8x128xf32> to vector<8xf32>
      %12 = vector.shape_cast %11 : vector<8xf32> to vector<8x1xf32>
      %c0_9 = arith.constant 0 : index
      %c0_10 = arith.constant 0 : index
      %13 = vector.load %arg4[%c0_9, %c0_10] : memref<8x128xf32, #tpu.memory_space<vmem>>, vector<8x128xf32>
      %14 = vector.broadcast %12 : vector<8x1xf32> to vector<8x128xf32>
      %15 = arith.mulf %14, %13 : vector<8x128xf32>
      %c0_11 = arith.constant 0 : index
      %c0_12 = arith.constant 0 : index
      %16 = vector.load %arg5[%c0_11, %c0_12] : memref<2x8xf32, #tpu.memory_space<vmem>>, vector<2x8xf32>
      %cst_13 = arith.constant dense<0.000000e+00> : vector<2x128xf32>
      %17 = tpu.matmul %16, %15, %cst_13 {dimension_numbers = #tpu.dot_dimension_numbers<[1], [0], [0], [1], [0, 0, 1, 1], [], []>} : vector<2x8xf32>, vector<8x128xf32>, vector<2x128xf32> -> vector<2x128xf32>
      %c0_14 = arith.constant 0 : index
      %c0_15 = arith.constant 0 : index
      %18 = vector.load %arg6[%c0_14, %c0_15] : memref<128x128xf32, #tpu.memory_space<vmem>>, vector<128x128xf32>
      %cst_16 = arith.constant dense<0.000000e+00> : vector<2x128xf32>
      %19 = tpu.matmul %17, %18, %cst_16 {dimension_numbers = #tpu.dot_dimension_numbers<[1], [0], [0], [1], [0, 0, 1, 1], [], []>} : vector<2x128xf32>, vector<128x128xf32>, vector<2x128xf32> -> vector<2x128xf32>
      %c0_17 = arith.constant 0 : index
      %c0_18 = arith.constant 0 : index
      %20 = vector.load %arg3[%c0_17, %c0_18] : memref<2x64xf32, #tpu.memory_space<vmem>>, vector<2x64xf32>
      %c0_19 = arith.constant 0 : index
      %c0_20 = arith.constant 0 : index
      %21 = vector.load %arg7[%c0_19, %c0_20] : memref<64x128xf32, #tpu.memory_space<vmem>>, vector<64x128xf32>
      %cst_21 = arith.constant dense<0.000000e+00> : vector<2x128xf32>
      %22 = tpu.matmul %20, %21, %cst_21 {dimension_numbers = #tpu.dot_dimension_numbers<[1], [0], [0], [1], [0, 0, 1, 1], [], []>} : vector<2x64xf32>, vector<64x128xf32>, vector<2x128xf32> -> vector<2x128xf32>
      %23 = arith.addf %19, %22 : vector<2x128xf32>
      %c0_22 = arith.constant 0 : index
      %c0_23 = arith.constant 0 : index
      %24 = vector.load %arg8[%c0_22, %c0_23] : memref<2x128xf32, #tpu.memory_space<vmem>>, vector<2x128xf32>
      tpu.vector_store %arg8[%c0_22, %c0_23], %23 {strides = array<i32>} : memref<2x128xf32, #tpu.memory_space<vmem>>, vector<2x128xf32>,
    } else {
    }
    return
  }
  func.func @transform_0(%arg0: i32, %arg1: i32) -> (i32, i32) {
    %c0_i32 = arith.constant 0 : i32
    return %arg0, %arg1 : i32, i32
  }
  func.func @transform_1(%arg0: i32, %arg1: i32) -> (i32, i32) {
    %c0_i32 = arith.constant 0 : i32
    %c0_i32_0 = arith.constant 0 : i32
    return %arg0, %c0_i32 : i32, i32
  }
  func.func @transform_2(%arg0: i32, %arg1: i32) -> (i32, i32) {
    %c0_i32 = arith.constant 0 : i32
    %c0_i32_0 = arith.constant 0 : i32
    %c0_i32_1 = arith.constant 0 : i32
    return %c0_i32, %c0_i32_0 : i32, i32
  }
  func.func @transform_3(%arg0: i32, %arg1: i32) -> (i32, i32) {
    %c0_i32 = arith.constant 0 : i32
    %c0_i32_0 = arith.constant 0 : i32
    %c0_i32_1 = arith.constant 0 : i32
    return %c0_i32, %c0_i32_0 : i32, i32
  }
  func.func @transform_4(%arg0: i32, %arg1: i32) -> (i32, i32) {
    %c0_i32 = arith.constant 0 : i32
    %c0_i32_0 = arith.constant 0 : i32
    %c0_i32_1 = arith.constant 0 : i32
    return %c0_i32, %c0_i32_0 : i32, i32
  }
  func.func @transform_5(%arg0: i32, %arg1: i32) -> (i32, i32) {
    %c0_i32 = arith.constant 0 : i32
    %c0_i32_0 = arith.constant 0 : i32
    %c0_i32_1 = arith.constant 0 : i32
    return %c0_i32, %c0_i32_0 : i32, i32
  }
  func.func @transform_6(%arg0: i32, %arg1: i32) -> (i32, i32) {
    %c0_i32 = arith.constant 0 : i32
    %c0_i32_0 = arith.constant 0 : i32
    return %arg0, %c0_i32 : i32, i32
  }
}

</mosaic_0001>

<llo_original>
// kernel: forward.1
$region0: #{forward.1}
  #allocation0 [shape = 'u32[]', space=smem, size = 0x4, offset = 0x4, fixed_abs, tag = 'smem constant byte address 0x4 - core index']
  #allocation1 [shape = 'u32[144,128]{1,0:T(1,128)}', space=vmem, size = 0x12000, scoped, tag = 'internal scratch']
  #allocation2 [shape = 'f32[8,128]{1,0:T(8,128)}', space=vmem, size = 0x1000, scoped, tag = 'scratch operand']
  %s0 = inlined_call_operand.vmem [shape: f32[8,256], index: 0, kind: input, shape index: {}]
  %s1 = inlined_call_operand.vmem [shape: f32[2,64], index: 1, kind: input, shape index: {}]
  %s2 = inlined_call_operand.vmem [shape: f32[8,128], index: 2, kind: input, shape index: {}]
  %s3 = inlined_call_operand.vmem [shape: f32[2,8], index: 3, kind: input, shape index: {}]
  %s4 = inlined_call_operand.vmem [shape: f32[128,128], index: 4, kind: input, shape index: {}]
  %s5 = inlined_call_operand.hbm [shape: f32[64,128], index: 5, kind: input, shape index: {}]
  %s6 = inlined_call_operand.hbm [shape: f32[2,128], index: 6, kind: output, shape index: {}]
  %s7 = sld [smem:[#allocation0]]
  $region69: #{forward.1} parent=0
    _
  %s9 = ssub.s32 1, %s7
  %s10 = scalar_select 0, %s9, %s7
  $region1: #{forward.1} parent=0
    #allocation3 [shape = 'u8[32768]{0}', space=vmem, size = 0x8000, scoped, tag = 'input window, operand 5, single buffered']
    #allocation4 [shape = 's32[2]{0}', space=sflag, size = 0x8, scoped, tag = 'scoped memory for forward.1']
    #allocation5 [shape = 's32[2]{0}', space=sflag, size = 0x8, scoped, tag = 'scoped memory for forward.1']
    #allocation6 [shape = 'u8[1024]{0}', space=vmem, size = 0x400, scoped, tag = 'output window, operand 0, single buffered']
    %11 = vsyncpa [#allocation4], 0
    %12 = vsyncpa [#allocation5], 0
    loop: start=0, step=1, limit=4
    $region2: #{forward.1} parent=1 // loop_pre_header
      _
    $region3: #{forward.1} parent=1 // loop_header
      %s14 = sphi 0, %s18
      %p15 = scmp.ge.s32.totalorder %s14, 4
      %s21 = sphi 0, %s33
      %s22 = sphi 0, %s29
      %s23 = sphi 0, %s21
      %s24 = sphi 0, %s22
      %s25 = sphi 0, %s23
      %s26 = sphi 0, %s24
      %s38 = sphi 0, %s40
      %s41 = sphi 0, %s38
      %s42 = sphi 0, %s41
      %s58 = sphi 0, %s42
      %s64 = sphi 0, %s66
      %s67 = sphi 0, %s64
      %s68 = sphi 0, %s67
      %s84 = sphi 0, %s68
      %s88 = sphi 0, %s88
      %s90 = sphi 0, %s88
      %s91 = sphi 0, %s90
      %s105 = sphi 0, %s91
      %s109 = sphi 0, %s109
      %s111 = sphi 0, %s109
      %s112 = sphi 0, %s111
      %s126 = sphi 0, %s112
      %s130 = sphi 0, %s130
      %s132 = sphi 0, %s130
      %s133 = sphi 0, %s132
      %s147 = sphi 0, %s133
      %s151 = sphi 0, %s151
      %s153 = sphi 0, %s151
      %s154 = sphi 0, %s153
      %s168 = sphi 0, %s154
      %s174 = sphi 0, %s176
      %s177 = sphi 0, %s174
      %s178 = sphi 0, %s177
      %s194 = sphi 0, %s178
    $region4: #{forward.1} parent=1 // loop_header_branch
      %17 = sbr.rel (%p15) target = $region8
    $region5: #{forward.1} parent=1 // loop_body
      %s19 = ssub.s32 %s14, 1
      %s20 = ssub.s32 %s14, 2
      %s27 = sadd.s32 1, %s22
      %p28 = scmp.ge.s32.totalorder %s27, 2
      %s29 = scalar_select %p28, 0, %s27
      %s30 = sadd.s32 1, %s21
      %s31 = scalar_select %p28, %s30, %s21
      %p32 = scmp.ge.s32.totalorder %s31, 1
      %s33 = scalar_select %p32, 0, %s31
      %s34 = ssub.s32 %s21, %s33
      %s35 = ssub.s32 %s22, %s29
      %s36 = sor.u32 %s34, %s35
      %p37 = scmp.eq.s32.totalorder %s36, 0
      %s39 = sadd.s32 %s38, 1
      %s40 = scalar_select %p37, %s38, %s39
      %p43 = pneg %p37
      %p44 = scmp.eq.s32.totalorder %s14, 1
      %p45 = por %p43, %p44
      %p46 = scmp.ne.s32.totalorder %s38, %s41
      %p47 = scmp.eq.s32.totalorder %s14, 0
      %p48 = por %p46, %p47
      %p49 = scmp.ne.s32.totalorder %s38, %s41
      %p50 = scmp.eq.s32.totalorder %s19, 1
      %p51 = por %p49, %p50
      %p52 = scmp.ne.s32.totalorder %s41, %s42
      %p53 = scmp.eq.s32.totalorder %s19, 0
      %p54 = por %p52, %p53
      %p55 = scmp.ne.s32.totalorder %s41, %s42
      %p56 = scmp.eq.s32.totalorder %s20, 1
      %p57 = por %p55, %p56
      %p59 = scmp.ne.s32.totalorder %s42, %s58
      %p60 = scmp.eq.s32.totalorder %s20, 0
      %p61 = por %p59, %p60
      %s62 = ssub.s32 %s21, %s33
      %p63 = scmp.eq.s32.totalorder %s62, 0
      %s65 = sadd.s32 %s64, 1
      %s66 = scalar_select %p63, %s64, %s65
      %p69 = pneg %p63
      %p70 = scmp.eq.s32.totalorder %s14, 1
      %p71 = por %p69, %p70
      %p72 = scmp.ne.s32.totalorder %s64, %s67
      %p73 = scmp.eq.s32.totalorder %s14, 0
      %p74 = por %p72, %p73
      %p75 = scmp.ne.s32.totalorder %s64, %s67
      %p76 = scmp.eq.s32.totalorder %s19, 1
      %p77 = por %p75, %p76
      %p78 = scmp.ne.s32.totalorder %s67, %s68
      %p79 = scmp.eq.s32.totalorder %s19, 0
      %p80 = por %p78, %p79
      %p81 = scmp.ne.s32.totalorder %s67, %s68
      %p82 = scmp.eq.s32.totalorder %s20, 1
      %p83 = por %p81, %p82
      %p85 = scmp.ne.s32.totalorder %s68, %s84
      %p86 = scmp.eq.s32.totalorder %s20, 0
      %p87 = por %p85, %p86
      %s89 = sadd.s32 %s88, 1
      %p92 = scmp.eq.s32.totalorder %s14, 1
      %p93 = scmp.ne.s32.totalorder %s88, %s90
      %p94 = scmp.eq.s32.totalorder %s14, 0
      %p95 = por %p93, %p94
      %p96 = scmp.ne.s32.totalorder %s88, %s90
      %p97 = scmp.eq.s32.totalorder %s19, 1
      %p98 = por %p96, %p97
      %p99 = scmp.ne.s32.totalorder %s90, %s91
      %p100 = scmp.eq.s32.totalorder %s19, 0
      %p101 = por %p99, %p100
      %p102 = scmp.ne.s32.totalorder %s90, %s91
      %p103 = scmp.eq.s32.totalorder %s20, 1
      %p104 = por %p102, %p103
      %p106 = scmp.ne.s32.totalorder %s91, %s105
      %p107 = scmp.eq.s32.totalorder %s20, 0
      %p108 = por %p106, %p107
      %s110 = sadd.s32 %s109, 1
      %p113 = scmp.eq.s32.totalorder %s14, 1
      %p114 = scmp.ne.s32.totalorder %s109, %s111
      %p115 = scmp.eq.s32.totalorder %s14, 0
      %p116 = por %p114, %p115
      %p117 = scmp.ne.s32.totalorder %s109, %s111
      %p118 = scmp.eq.s32.totalorder %s19, 1
      %p119 = por %p117, %p118
      %p120 = scmp.ne.s32.totalorder %s111, %s112
      %p121 = scmp.eq.s32.totalorder %s19, 0
      %p122 = por %p120, %p121
      %p123 = scmp.ne.s32.totalorder %s111, %s112
      %p124 = scmp.eq.s32.totalorder %s20, 1
      %p125 = por %p123, %p124
      %p127 = scmp.ne.s32.totalorder %s112, %s126
      %p128 = scmp.eq.s32.totalorder %s20, 0
      %p129 = por %p127, %p128
      %s131 = sadd.s32 %s130, 1
      %p134 = scmp.eq.s32.totalorder %s14, 1
      %p135 = scmp.ne.s32.totalorder %s130, %s132
      %p136 = scmp.eq.s32.totalorder %s14, 0
      %p137 = por %p135, %p136
      %p138 = scmp.ne.s32.totalorder %s130, %s132
      %p139 = scmp.eq.s32.totalorder %s19, 1
      %p140 = por %p138, %p139
      %p141 = scmp.ne.s32.totalorder %s132, %s133
      %p142 = scmp.eq.s32.totalorder %s19, 0
      %p143 = por %p141, %p142
      %p144 = scmp.ne.s32.totalorder %s132, %s133
      %p145 = scmp.eq.s32.totalorder %s20, 1
      %p146 = por %p144, %p145
      %p148 = scmp.ne.s32.totalorder %s133, %s147
      %p149 = scmp.eq.s32.totalorder %s20, 0
      %p150 = por %p148, %p149
      %s152 = sadd.s32 %s151, 1
      %p155 = scmp.eq.s32.totalorder %s14, 1
      %p156 = scmp.ne.s32.totalorder %s151, %s153
      %p157 = scmp.eq.s32.totalorder %s14, 0
      %p158 = por %p156, %p157
      %p159 = scmp.ne.s32.totalorder %s151, %s153
      %p160 = scmp.eq.s32.totalorder %s19, 1
      %p161 = por %p159, %p160
      %p162 = scmp.ne.s32.totalorder %s153, %s154
      %p163 = scmp.eq.s32.totalorder %s19, 0
      %p164 = por %p162, %p163
      %p165 = scmp.ne.s32.totalorder %s153, %s154
      %p166 = scmp.eq.s32.totalorder %s20, 1
      %p167 = por %p165, %p166
      %p169 = scmp.ne.s32.totalorder %s154, %s168
      %p170 = scmp.eq.s32.totalorder %s20, 0
      %p171 = por %p169, %p170
      %s172 = ssub.s32 %s21, %s33
      %p173 = scmp.eq.s32.totalorder %s172, 0
      %s175 = sadd.s32 %s174, 1
      %s176 = scalar_select %p173, %s174, %s175
      %p179 = pneg %p173
      %p180 = scmp.eq.s32.totalorder %s14, 1
      %p181 = por %p179, %p180
      %p182 = scmp.ne.s32.totalorder %s174, %s177
      %p183 = scmp.eq.s32.totalorder %s14, 0
      %p184 = por %p182, %p183
      %p185 = scmp.ne.s32.totalorder %s174, %s177
      %p186 = scmp.eq.s32.totalorder %s19, 1
      %p187 = por %p185, %p186
      %p188 = scmp.ne.s32.totalorder %s177, %s178
      %p189 = scmp.eq.s32.totalorder %s19, 0
      %p190 = por %p188, %p189
      %p191 = scmp.ne.s32.totalorder %s177, %s178
      %p192 = scmp.eq.s32.totalorder %s20, 1
      %p193 = por %p191, %p192
      %p195 = scmp.ne.s32.totalorder %s178, %s194
      %p196 = scmp.eq.s32.totalorder %s20, 0
      %p197 = por %p195, %p196
      %p198 = scmp.le.s32.totalorder 1, %s14
      %p199 = scmp.lt.s32.totalorder %s14, 3
      %p200 = pnand %p198, %p199
      %p201 = pneg %p200
      // Predicated region
      $region9: #{forward.1} parent=5 // pred_check
        _
      $region10: #{forward.1} parent=5 // pred_check_branch
        %203 = sbr.rel (%p200) target = $region12
      $region11: #{forward.1} parent=5 // pred_region
        %s204 = ssub.s32 %s14, 1
        // Predicated region
        $region13: #{forward.1} parent=11 // pred_check
          %p205 = pneg %p80
        $region14: #{forward.1} parent=11 // pred_check_branch
          %207 = sbr.rel (%p205) target = $region16
        $region15: #{forward.1} parent=11 // pred_region
          %p208 = scmp.lt.s32.totalorder %s23, 0
          %s209 = scalar_select %p208, %s23, 0
          %s210 = smul.addr %s209, 2
          %s211 = scalar_lea.vmem %s1, %s210
        $region16: #{forward.1} parent=11 // pred_fallthru
          _
        // Predicated region
        $region17: #{forward.1} parent=11 // pred_check
          %p212 = pneg %p101
        $region18: #{forward.1} parent=11 // pred_check_branch
          %214 = sbr.rel (%p212) target = $region20
        $region19: #{forward.1} parent=11 // pred_region
          _
        $region20: #{forward.1} parent=11 // pred_fallthru
          _
        // Predicated region
        $region21: #{forward.1} parent=11 // pred_check
          %p215 = pneg %p122
        $region22: #{forward.1} parent=11 // pred_check_branch
          %217 = sbr.rel (%p215) target = $region24
        $region23: #{forward.1} parent=11 // pred_region
          _
        $region24: #{forward.1} parent=11 // pred_fallthru
          _
        // Predicated region
        $region25: #{forward.1} parent=11 // pred_check
          %p218 = pneg %p143
        $region26: #{forward.1} parent=11 // pred_check_branch
          %220 = sbr.rel (%p218) target = $region28
        $region27: #{forward.1} parent=11 // pred_region
          _
        $region28: #{forward.1} parent=11 // pred_fallthru
          _
        // Predicated region
        $region29: #{forward.1} parent=11 // pred_check
          %p221 = pneg %p164
        $region30: #{forward.1} parent=11 // pred_check_branch
          %223 = sbr.rel (%p221) target = $region32
        $region31: #{forward.1} parent=11 // pred_region
          %s225 = ssub.s32 1024, 1024
          %226 = vsyncadd [#allocation4], %s225
          %s227 = sshll.u32 [#allocation3], 4
          %s228 = int_to_ptr.vmem [resolvable:$true] %s227
          %233 = dma.hbm_to_vmem [thread:$0]  %s5, 1024, %s228, [#allocation4], 128, 128, 8
        $region32: #{forward.1} parent=11 // pred_fallthru
          _
      $region12: #{forward.1} parent=5 // pred_fallthru
        _
      %p234 = scmp.lt.s32.totalorder %s14, 2
      // Predicated region
      $region33: #{forward.1} parent=5 // pred_check
        %p235 = pneg %p234
      $region34: #{forward.1} parent=5 // pred_check_branch
        %237 = sbr.rel (%p235) target = $region36
      $region35: #{forward.1} parent=5 // pred_region
        // Predicated region
        $region37: #{forward.1} parent=35 // pred_check
          %p238 = pneg %p48
        $region38: #{forward.1} parent=35 // pred_check_branch
          %240 = sbr.rel (%p238) target = $region40
        $region39: #{forward.1} parent=35 // pred_region
          %p241 = scmp.lt.s32.totalorder %s21, 0
          %s242 = scalar_select %p241, %s21, 0
          %p243 = scmp.lt.s32.totalorder %s22, 1
          %s244 = scalar_select %p243, %s22, 1
          %s245 = smul.addr %s242, 2
          %s246 = sadd.s32 %s244, %s245
          %s247 = smul.addr %s246, 8
          %s248 = scalar_lea.vmem %s0, %s247
        $region40: #{forward.1} parent=35 // pred_fallthru
          _
      $region36: #{forward.1} parent=5 // pred_fallthru
        _
      %p249 = scmp.le.s32.totalorder 1, %s14
      %p250 = scmp.lt.s32.totalorder %s14, 3
      %p251 = pnand %p249, %p250
      %p252 = pneg %p251
      // Predicated region
      $region41: #{forward.1} parent=5 // pred_check
        _
      $region42: #{forward.1} parent=5 // pred_check_branch
        %254 = sbr.rel (%p251) target = $region44
      $region43: #{forward.1} parent=5 // pred_region
        %s255 = ssub.s32 %s14, 1
        // Predicated region
        $region45: #{forward.1} parent=43 // pred_check
          %p256 = pneg %p164
        $region46: #{forward.1} parent=43 // pred_check_branch
          %258 = sbr.rel (%p256) target = $region48
        $region47: #{forward.1} parent=43 // pred_region
          %259 = dma.done [#allocation4], 1024
        $region48: #{forward.1} parent=43 // pred_fallthru
          _
        %p260 = scmp.lt.s32.totalorder %s23, 0
        %s261 = scalar_select %p260, %s23, 0
        %p262 = scmp.lt.s32.totalorder %s24, 1
        %s263 = scalar_select %p262, %s24, 1
        %s264 = smul.addr %s261, 2
        %s265 = sadd.s32 %s263, %s264
        %s266 = smul.addr %s265, 8
        %s267 = scalar_lea.vmem %s0, %s266
        %p268 = pneg %p54
        %p269 = pneg %p51
        %p270 = scmp.lt.s32.totalorder %s23, 0
        %s271 = scalar_select %p270, %s23, 0
        %s272 = smul.addr %s271, 2
        %s273 = scalar_lea.vmem %s1, %s272
        %p274 = pneg %p80
        %p275 = pneg %p77
        %p276 = pneg %p101
        %p277 = pneg %p98
        %p278 = pneg %p122
        %p279 = pneg %p119
        %p280 = pneg %p143
        %p281 = pneg %p140
        %p282 = pneg %p164
        %p283 = pneg %p161
        %p284 = pneg %p190
        %p285 = pneg %p187
        %p286 = scmp.lt.s32.totalorder %s23, 0
        %s287 = scalar_select %p286, %s23, 0
        %p288 = scmp.lt.s32.totalorder %s24, 1
        %s289 = scalar_select %p288, %s24, 1
        %s290 = smul.addr %s287, 2
        %s291 = sadd.s32 %s289, %s290
        %s292 = smul.addr %s291, 8
        %s293 = scalar_lea.vmem %s0, %s292
        %p294 = scmp.lt.s32.totalorder %s23, 0
        %s295 = scalar_select %p294, %s23, 0
        %s296 = smul.addr %s295, 2
        %s297 = scalar_lea.vmem %s1, %s296
        %p298 = scmp.eq.s32.totalorder %s24, 0
        // Predicated region
        $region49: #{forward.1} parent=43 // pred_check
          %p299 = pneg %p298
        $region50: #{forward.1} parent=43 // pred_check_branch
          %301 = sbr.rel (%p299) target = $region52
        $region51: #{forward.1} parent=43 // pred_region
          %302 = vst [vmem:[#allocation2] sm:$0xff] 0.0
        $region52: #{forward.1} parent=43 // pred_fallthru
          _
        %v303 = vld [vmem:[%s293] sm:$0xff]
        %v304 = vld [vmem:[#allocation2] sm:$0xff]
        %v305 = vadd.f32 %v304, %v303
        %306 = vst [vmem:[#allocation2] sm:$0xff] %v305
        %p307 = scmp.eq.s32.totalorder %s24, 1
        // Predicated region
        $region53: #{forward.1} parent=43 // pred_check
          %p308 = pneg %p307
        $region54: #{forward.1} parent=43 // pred_check_branch
          %310 = sbr.rel (%p308) target = $region56
        $region55: #{forward.1} parent=43 // pred_region
          %v311 = vld [vmem:[#allocation2] sm:$0xff]
          %312 = vadd.xlane.f32.xlu0 %v311
          %v313 = vpop.xlane.xlu0 %312
          %v314 = vld [vmem:[%s2] sm:$0xff]
          %v315 = vmul.f32 %v313, %v314
          %v316 = vld [vmem:[%s3] sm:$0x3]
          %vm317 = vcmask 64512
          %v319 = vsel %vm317, %v316, 0
          %321 = vmatprep.subr.mxu0 0.0
          %322 = vmatpush1.msra.mxu0 %v315
          %323 = vmatprep.subr.mxu0 0.0
          %324 = vmatpush1.msra.mxu0 0.0
          %325 = vmatprep.subr.mxu0 0.0
          %326 = vmatpush1.msra.mxu0 0.0
          %327 = vmatprep.subr.mxu0 0.0
          %328 = vmatpush1.msra.mxu0 0.0
          %329 = vmatprep.subr.mxu0 0.0
          %330 = vmatpush1.msra.mxu0 0.0
          %331 = vmatprep.subr.mxu0 0.0
          %332 = vmatpush1.msra.mxu0 0.0
          %333 = vmatprep.subr.mxu0 0.0
          %334 = vmatpush1.msra.mxu0 0.0
          %335 = vmatprep.subr.mxu0 0.0
          %336 = vmatpush1.msra.mxu0 0.0
          %337 = vmatprep.subr.mxu0 0.0
          %338 = vmatpush1.msra.mxu0 0.0
          %339 = vmatprep.subr.mxu0 0.0
          %340 = vmatpush1.msra.mxu0 0.0
          %341 = vmatprep.subr.mxu0 0.0
          %342 = vmatpush1.msra.mxu0 0.0
          %343 = vmatprep.subr.mxu0 0.0
          %344 = vmatpush1.msra.mxu0 0.0
          %345 = vmatprep.subr.mxu0 0.0
          %346 = vmatpush1.msra.mxu0 0.0
          %347 = vmatprep.subr.mxu0 0.0
          %348 = vmatpush1.msra.mxu0 0.0
          %349 = vmatprep.subr.mxu0 0.0
          %350 = vmatpush1.msra.mxu0 0.0
          %351 = vmatprep.subr.mxu0 0.0
          %352 = vmatpush1.msra.mxu0 0.0
          %353 = vmatprep.subr.mxu0 0.0
          %354 = vmatpush1.msra.mxu0 0.0
          %355 = vmatprep.subr.mxu0 0.0
          %356 = vmatpush1.msra.mxu0 0.0
          %357 = vmatprep.subr.mxu0 0.0
          %358 = vmatpush1.msra.mxu0 0.0
          %359 = vmatprep.subr.mxu0 0.0
          %360 = vmatpush1.msra.mxu0 0.0
          %361 = vmatprep.subr.mxu0 0.0
          %362 = vmatpush1.msra.mxu0 0.0
          %363 = vmatprep.subr.mxu0 0.0
          %364 = vmatpush1.msra.mxu0 0.0
          %365 = vmatprep.subr.mxu0 0.0
          %366 = vmatpush1.msra.mxu0 0.0
          %367 = vmatprep.subr.mxu0 0.0
          %368 = vmatpush1.msra.mxu0 0.0
          %369 = vmatprep.subr.mxu0 0.0
          %370 = vmatpush1.msra.mxu0 0.0
          %371 = vmatprep.subr.mxu0 0.0
          %372 = vmatpush1.msra.mxu0 0.0
          %373 = vmatprep.subr.mxu0 0.0
          %374 = vmatpush1.msra.mxu0 0.0
          %375 = vmatprep.subr.mxu0 0.0
          %376 = vmatpush1.msra.mxu0 0.0
          %377 = vmatprep.subr.mxu0 0.0
          %378 = vmatpush1.msra.mxu0 0.0
          %379 = vmatprep.subr.mxu0 0.0
          %380 = vmatpush1.msra.mxu0 0.0
          %381 = vmatprep.subr.mxu0 0.0
          %382 = vmatpush1.msra.mxu0 0.0
          %383 = vmatprep.subr.mxu0 0.0
          %384 = vmatpush1.msra.mxu0 0.0
          %385 = vmatprep.mubr.f32.mxu0 0.0
          %386 = vmatmul.mubr.f32.gmra.mrb[0].mxu0 %v319
          %v387 = vpop.f32.mrb[0].mxu0
          %v388 = vadd.f32 0.0, %v387
          %v389 = vpop.f32.mrb[0].mxu0
          %390 = vdwg.mxu0
          %v391 = vld [vmem:[%s4] sm:$0xff]
          %v392 = vld [vmem:[%s4 + $0x8] sm:$0xff]
          %v393 = vld [vmem:[%s4 + $0x10] sm:$0xff]
          %v394 = vld [vmem:[%s4 + $0x18] sm:$0xff]
          %v395 = vld [vmem:[%s4 + $0x20] sm:$0xff]
          %v396 = vld [vmem:[%s4 + $0x28] sm:$0xff]
          %v397 = vld [vmem:[%s4 + $0x30] sm:$0xff]
          %v398 = vld [vmem:[%s4 + $0x38] sm:$0xff]
          %v399 = vld [vmem:[%s4 + $0x40] sm:$0xff]
          %v400 = vld [vmem:[%s4 + $0x48] sm:$0xff]
          %v401 = vld [vmem:[%s4 + $0x50] sm:$0xff]
          %v402 = vld [vmem:[%s4 + $0x58] sm:$0xff]
          %v403 = vld [vmem:[%s4 + $0x60] sm:$0xff]
          %v404 = vld [vmem:[%s4 + $0x68] sm:$0xff]
          %v405 = vld [vmem:[%s4 + $0x70] sm:$0xff]
          %v406 = vld [vmem:[%s4 + $0x78] sm:$0xff]
          %v407 = vld [vmem:[%s297] sm:$0x3]
          %v408 = vld [vmem:[#allocation3] sm:$0xff]
          %v409 = vld [vmem:[#allocation3 + $0x8] sm:$0xff]
          %v410 = vld [vmem:[#allocation3 + $0x10] sm:$0xff]
          %v411 = vld [vmem:[#allocation3 + $0x18] sm:$0xff]
          %v412 = vld [vmem:[#allocation3 + $0x20] sm:$0xff]
          %v413 = vld [vmem:[#allocation3 + $0x28] sm:$0xff]
          %v414 = vld [vmem:[#allocation3 + $0x30] sm:$0xff]
          %v415 = vld [vmem:[#allocation3 + $0x38] sm:$0xff]
          %vm416 = vcmask 523264
          %v418 = vsel %vm416, %v407, 0
          %420 = vmatprep.subr.mxu0 0.0
          %421 = vmatpush1.msra.mxu0 %v408
          %422 = vmatprep.subr.mxu0 0.0
          %423 = vmatpush1.msra.mxu0 %v409
          %424 = vmatprep.subr.mxu0 0.0
          %425 = vmatpush1.msra.mxu0 %v410
          %426 = vmatprep.subr.mxu0 0.0
          %427 = vmatpush1.msra.mxu0 %v411
          %428 = vmatprep.subr.mxu0 0.0
          %429 = vmatpush1.msra.mxu0 %v412
          %430 = vmatprep.subr.mxu0 0.0
          %431 = vmatpush1.msra.mxu0 %v413
          %432 = vmatprep.subr.mxu0 0.0
          %433 = vmatpush1.msra.mxu0 %v414
          %434 = vmatprep.subr.mxu0 0.0
          %435 = vmatpush1.msra.mxu0 %v415
          %436 = vmatprep.subr.mxu0 0.0
          %437 = vmatpush1.msra.mxu0 0.0
          %438 = vmatprep.subr.mxu0 0.0
          %439 = vmatpush1.msra.mxu0 0.0
          %440 = vmatprep.subr.mxu0 0.0
          %441 = vmatpush1.msra.mxu0 0.0
          %442 = vmatprep.subr.mxu0 0.0
          %443 = vmatpush1.msra.mxu0 0.0
          %444 = vmatprep.subr.mxu0 0.0
          %445 = vmatpush1.msra.mxu0 0.0
          %446 = vmatprep.subr.mxu0 0.0
          %447 = vmatpush1.msra.mxu0 0.0
          %448 = vmatprep.subr.mxu0 0.0
          %449 = vmatpush1.msra.mxu0 0.0
          %450 = vmatprep.subr.mxu0 0.0
          %451 = vmatpush1.msra.mxu0 0.0
          %452 = vmatprep.subr.mxu0 0.0
          %453 = vmatpush1.msra.mxu0 0.0
          %454 = vmatprep.subr.mxu0 0.0
          %455 = vmatpush1.msra.mxu0 0.0
          %456 = vmatprep.subr.mxu0 0.0
          %457 = vmatpush1.msra.mxu0 0.0
          %458 = vmatprep.subr.mxu0 0.0
          %459 = vmatpush1.msra.mxu0 0.0
          %460 = vmatprep.subr.mxu0 0.0
          %461 = vmatpush1.msra.mxu0 0.0
          %462 = vmatprep.subr.mxu0 0.0
          %463 = vmatpush1.msra.mxu0 0.0
          %464 = vmatprep.subr.mxu0 0.0
          %465 = vmatpush1.msra.mxu0 0.0
          %466 = vmatprep.subr.mxu0 0.0
          %467 = vmatpush1.msra.mxu0 0.0
          %468 = vmatprep.subr.mxu0 0.0
          %469 = vmatpush1.msra.mxu0 0.0
          %470 = vmatprep.subr.mxu0 0.0
          %471 = vmatpush1.msra.mxu0 0.0
          %472 = vmatprep.subr.mxu0 0.0
          %473 = vmatpush1.msra.mxu0 0.0
          %474 = vmatprep.subr.mxu0 0.0
          %475 = vmatpush1.msra.mxu0 0.0
          %476 = vmatprep.subr.mxu0 0.0
          %477 = vmatpush1.msra.mxu0 0.0
          %478 = vmatprep.subr.mxu0 0.0
          %479 = vmatpush1.msra.mxu0 0.0
          %480 = vmatprep.subr.mxu0 0.0
          %481 = vmatpush1.msra.mxu0 0.0
          %482 = vmatprep.subr.mxu0 0.0
          %483 = vmatpush1.msra.mxu0 0.0
          %484 = vmatprep.mubr.f32.mxu0 0.0
          %485 = vmatmul.mubr.f32.gmra.mrb[0].mxu0 %v418
          %v486 = vpop.f32.mrb[0].mxu0
          %v487 = vadd.f32 0.0, %v486
          %v488 = vpop.f32.mrb[0].mxu0
          %489 = vdwg.mxu0
          %490 = vmatprep.subr.mxu0 0.0
          %491 = vmatpush1.msra.mxu0 %v391
          %492 = vmatprep.subr.mxu0 0.0
          %493 = vmatpush1.msra.mxu0 %v392
          %494 = vmatprep.subr.mxu0 0.0
          %495 = vmatpush1.msra.mxu0 %v393
          %496 = vmatprep.subr.mxu0 0.0
          %497 = vmatpush1.msra.mxu0 %v394
          %498 = vmatprep.subr.mxu0 0.0
          %499 = vmatpush1.msra.mxu0 %v395
          %500 = vmatprep.subr.mxu0 0.0
          %501 = vmatpush1.msra.mxu0 %v396
          %502 = vmatprep.subr.mxu0 0.0
          %503 = vmatpush1.msra.mxu0 %v397
          %504 = vmatprep.subr.mxu0 0.0
          %505 = vmatpush1.msra.mxu0 %v398
          %506 = vmatprep.subr.mxu0 0.0
          %507 = vmatpush1.msra.mxu0 %v399
          %508 = vmatprep.subr.mxu0 0.0
          %509 = vmatpush1.msra.mxu0 %v400
          %510 = vmatprep.subr.mxu0 0.0
          %511 = vmatpush1.msra.mxu0 %v401
          %512 = vmatprep.subr.mxu0 0.0
          %513 = vmatpush1.msra.mxu0 %v402
          %514 = vmatprep.subr.mxu0 0.0
          %515 = vmatpush1.msra.mxu0 %v403
          %516 = vmatprep.subr.mxu0 0.0
          %517 = vmatpush1.msra.mxu0 %v404
          %518 = vmatprep.subr.mxu0 0.0
          %519 = vmatpush1.msra.mxu0 %v405
          %520 = vmatprep.subr.mxu0 0.0
          %521 = vmatpush1.msra.mxu0 %v406
          %522 = vmatprep.subr.mxu0 0.0
          %523 = vmatpush1.msra.mxu0 0.0
          %524 = vmatprep.subr.mxu0 0.0
          %525 = vmatpush1.msra.mxu0 0.0
          %526 = vmatprep.subr.mxu0 0.0
          %527 = vmatpush1.msra.mxu0 0.0
          %528 = vmatprep.subr.mxu0 0.0
          %529 = vmatpush1.msra.mxu0 0.0
          %530 = vmatprep.subr.mxu0 0.0
          %531 = vmatpush1.msra.mxu0 0.0
          %532 = vmatprep.subr.mxu0 0.0
          %533 = vmatpush1.msra.mxu0 0.0
          %534 = vmatprep.subr.mxu0 0.0
          %535 = vmatpush1.msra.mxu0 0.0
          %536 = vmatprep.subr.mxu0 0.0
          %537 = vmatpush1.msra.mxu0 0.0
          %538 = vmatprep.subr.mxu0 0.0
          %539 = vmatpush1.msra.mxu0 0.0
          %540 = vmatprep.subr.mxu0 0.0
          %541 = vmatpush1.msra.mxu0 0.0
          %542 = vmatprep.subr.mxu0 0.0
          %543 = vmatpush1.msra.mxu0 0.0
          %544 = vmatprep.subr.mxu0 0.0
          %545 = vmatpush1.msra.mxu0 0.0
          %546 = vmatprep.subr.mxu0 0.0
          %547 = vmatpush1.msra.mxu0 0.0
          %548 = vmatprep.subr.mxu0 0.0
          %549 = vmatpush1.msra.mxu0 0.0
          %550 = vmatprep.subr.mxu0 0.0
          %551 = vmatpush1.msra.mxu0 0.0
          %552 = vmatprep.subr.mxu0 0.0
          %553 = vmatpush1.msra.mxu0 0.0
          %554 = vmatprep.mubr.f32.mxu0 0.0
          %555 = vmatmul.mubr.f32.gmra.mrb[0].mxu0 %v388
          %v556 = vpop.f32.mrb[0].mxu0
          %v557 = vadd.f32 %v487, %v556
          %v558 = vpop.f32.mrb[0].mxu0
          %559 = vdwg.mxu0
          %560 = vst [vmem:[#allocation6] sm:$0x3] %v557
        $region56: #{forward.1} parent=43 // pred_fallthru
          _
        // Predicated region
        $region57: #{forward.1} parent=43 // pred_check
          %p561 = pneg %p187
        $region58: #{forward.1} parent=43 // pred_check_branch
          %563 = sbr.rel (%p561) target = $region60
        $region59: #{forward.1} parent=43 // pred_region
          %s565 = ssub.s32 32, 32
          %566 = vsyncadd [#allocation5], %s565
          %s567 = smul.addr %s23, 32
          %s568 = scalar_lea.hbm %s6, %s567
          %s570 = sshll.u32 [#allocation6], 4
          %s571 = int_to_ptr.vmem [resolvable:$true] %s570
          %573 = dma.vmem_to_hbm [thread:$0]  %s571, 32, %s568, [#allocation5]
        $region60: #{forward.1} parent=43 // pred_fallthru
          _
        // Predicated region
        $region61: #{forward.1} parent=43 // pred_check
          %p574 = pneg %p187
        $region62: #{forward.1} parent=43 // pred_check_branch
          %576 = sbr.rel (%p574) target = $region64
        $region63: #{forward.1} parent=43 // pred_region
          %577 = dma.done [#allocation5], 32
        $region64: #{forward.1} parent=43 // pred_fallthru
          _
      $region44: #{forward.1} parent=5 // pred_fallthru
        _
      %p578 = scmp.le.s32.totalorder 2, %s14
      // Predicated region
      $region65: #{forward.1} parent=5 // pred_check
        %p579 = pneg %p578
      $region66: #{forward.1} parent=5 // pred_check_branch
        %581 = sbr.rel (%p579) target = $region68
      $region67: #{forward.1} parent=5 // pred_region
        %s582 = ssub.s32 %s14, 2
      $region68: #{forward.1} parent=5 // pred_fallthru
        _
    $region6: #{forward.1} parent=1 // loop_footer
      %s18 = sadd.s32 1, %s14
    $region7: #{forward.1} parent=1 // loop_footer_branch
      %13 = sbr.rel target = $region3
    $region8: #{forward.1} parent=1 // loop_exit
      _
    %583 = vsyncpa [#allocation4], 1
    %s584 = scalar_lea.sflag [#allocation4], 1
    %585 = vsyncpa %s584, 1
    %586 = vsyncpa [#allocation5], 1
    %s587 = scalar_lea.sflag [#allocation5], 1
    %588 = vsyncpa %s587, 1

</llo_original>
